<compile_context>
chip_gen: v7x
topology: tpu7x:2x2x1
jax: 0.10.0
libtpu: 0.0.40
codegen_flags: <defaults>
</compile_context>

<pallas_src>
import jax
import jax.numpy as jnp
from jax.experimental import pallas as pl
from jax.experimental.pallas import tpu as pltpu

TOTAL_NUMBER_OF_BEES = 64  # module-level constant in the original file


def _round_up(x, m):
    return (x + m - 1) // m * m


def _vmem_capacity_bytes():
    """Physical VMEM of the local TPU generation (fallback: v7x's 64 MiB/TC)."""
    try:
        info = pltpu.get_tpu_info()
        cap = int(getattr(info, "vmem_capacity_bytes", 0))
        if cap > 0:
            return cap
    except Exception:
        pass
    return 64 * 1024 * 1024


def _fused_head_kernel(z_ref, w_ref, b_ref, o_ref):
    """One lane-dense MXU matmul covering all three heads.

    z_ref : (tile_b, D)     VMEM  (double-buffered batch tile, f32 or bf16)
    w_ref : (D, O_pad)      VMEM  (resident fused weight, O_pad % 128 == 0)
    b_ref : (1, O_pad)      VMEM  (resident fused bias row, f32)
    o_ref : (tile_b, O_pad) VMEM  (f32 output tile, unmasked lane-dense stores)
    """
    acc = jnp.dot(z_ref[...], w_ref[...], preferred_element_type=jnp.float32)
    o_ref[...] = (acc + b_ref[...]).astype(o_ref.dtype)


def prepare_fused_params(params, dtype=jnp.float32):
    """One-time fusion of the three PyTorch-convention heads into a single
    lane-padded (D, O_pad) weight and a (1, O_pad) f32 bias row.

    `dtype` controls the streamed weight (and hence z) precision: bf16 halves
    the dominant HBM traffic while the matmul still accumulates in f32 and the
    bias add stays f32.  Pad columns get zero weight AND zero bias so they can
    be safely sliced away after the kernel.
    """
    n_bees, D = params["w_id"].shape
    o = n_bees + 2
    o_pad = _round_up(o, 128)
    # TODO(synk): if D is not 128-lane aligned, also zero-pad D here (and in
    # the producer of z) to avoid masked vector loads; no-op for aligned D.

    w_cat = jnp.concatenate(
        [params["w_id"], params["w_cls"], params["w_ang"]], axis=0)          # (o, D)
    w_fused = (jnp.zeros((D, o_pad), jnp.float32)
               .at[:, :o].set(w_cat.T)).astype(dtype)                        # (D, O_pad)

    b_cat = jnp.concatenate(
        [params["b_id"], params["b_cls"], params["b_ang"]], axis=0)          # (o,)
    b_fused = jnp.zeros((1, o_pad), jnp.float32).at[0, :o].set(b_cat)        # (1, O_pad)

    return w_fused, b_fused, n_bees


def _pick_tile_b(B, D, O_pad, stream_bytes):
    """Batch tile sized from the per-generation VMEM budget.

    Working set per grid step: 2x double-buffered z tile + 2x f32 out tile +
    2x (double-buffered) resident weight + bias.  Also guarantees >= 2 grid
    steps whenever B > 8 so v7x's two TensorCores both get work.
    """
    vmem_cap = _vmem_capacity_bytes()
    budget = min(vmem_cap // 2, 48 * 1024 * 1024)
    resident = 2 * D * O_pad * stream_bytes + 2 * O_pad * 4
    per_row = 2 * D * stream_bytes + 2 * O_pad * 4
    avail = max(budget - resident, 8 * per_row)
    tile_b = min(1024, max(8, (avail // per_row) // 8 * 8))
    if B <= tile_b:
        if B > 8:
            half = _round_up((B + 1) // 2, 8)
            if half < B:            # gives 2 grid steps (one per v7x TC)
                return half, vmem_cap
        return B, vmem_cap          # single full-extent block (always legal)
    return tile_b, vmem_cap         # B > tile_b => grid already has >= 2 steps


def linear_evaluation_head(z, w_fused, b_fused, n_bees):
    """Pallas forward pass on pre-fused parameters.

    z : (B, D).  Returns (id_logits (B, n_bees), class_logit (B, 1),
    angle_pred (B, 1)) -- same semantics as the PyTorch module's forward.
    """
    B, D = z.shape
    O_pad = w_fused.shape[1]
    assert w_fused.shape[0] == D

    # Stream z in the same dtype as the fused weight (bf16 halves HBM traffic).
    # TODO(synk): ideally the encoder emits z directly in this dtype so the
    # cast below never materializes an extra copy of z.
    if z.dtype != w_fused.dtype:
        z = z.astype(w_fused.dtype)
    stream_bytes = jnp.dtype(w_fused.dtype).itemsize

    tile_b, vmem_cap = _pick_tile_b(B, D, O_pad, stream_bytes)
    grid_b = pl.cdiv(B, tile_b)

    working_set = (2 * D * O_pad * stream_bytes + 2 * O_pad * 4
                   + tile_b * (2 * D * stream_bytes + 2 * O_pad * 4))
    vmem_limit = int(min(max(2 * working_set + (4 << 20), 32 << 20),
                         vmem_cap * 3 // 4))

    out = pl.pallas_call(
        _fused_head_kernel,
        out_shape=jax.ShapeDtypeStruct((B, O_pad), jnp.float32),
        grid=(grid_b,),
        in_specs=[
            pl.BlockSpec((tile_b, D), lambda i: (i, 0)),   # z: tiled over batch
            pl.BlockSpec((D, O_pad), lambda i: (0, 0)),    # fused weight: resident
            pl.BlockSpec((1, O_pad), lambda i: (0, 0)),    # fused bias: resident
        ],
        out_specs=pl.BlockSpec((tile_b, O_pad), lambda i: (i, 0)),
        compiler_params=pltpu.CompilerParams(
            dimension_semantics=("parallel",),
            vmem_limit_bytes=vmem_limit,
        ),
    )(z, w_fused, b_fused)

    id_logits = out[:, :n_bees]
    class_logit = out[:, n_bees:n_bees + 1]
    angle_pred = out[:, n_bees + 1:n_bees + 2]
    return id_logits, class_logit, angle_pred


def init_params(key, model_output_dim, n_bees=TOTAL_NUMBER_OF_BEES):
    """Deterministic synthetic init mirroring the nn.Linear shapes in __init__."""
    k1, k2, k3, k4, k5, k6 = jax.random.split(key, 6)
    bound = 1.0 / jnp.sqrt(model_output_dim)
    u = lambda k, shape: jax.random.uniform(k, shape, jnp.float32, -bound, bound)
    return {
        "w_id": u(k1, (n_bees, model_output_dim)),
        "b_id": u(k2, (n_bees,)),
        "w_cls": u(k3, (1, model_output_dim)),
        "b_cls": u(k4, (1,)),
        "w_ang": u(k5, (1, model_output_dim)),
        "b_ang": u(k6, (1,)),
    }


if __name__ == "__main__":
    batch = 2
    model_output_dim = 32

    key = jax.random.PRNGKey(0)
    kz, kp = jax.random.split(key)
    z = jax.random.normal(kz, (batch, model_output_dim), jnp.float32)
    params = init_params(kp, model_output_dim)

    # Plain-JAX reference (same math as the PyTorch module).
    ref_id = z @ params["w_id"].T + params["b_id"]
    ref_cls = z @ params["w_cls"].T + params["b_cls"]
    ref_ang = z @ params["w_ang"].T + params["b_ang"]

    # --- f32 path: exact module semantics --------------------------------
    w_fused, b_fused, n_bees = prepare_fused_params(params)
    w_fused, b_fused = jax.block_until_ready((w_fused, b_fused))

    id_logits, class_logit, angle_pred = linear_evaluation_head(
        z, w_fused, b_fused, n_bees)
    jax.block_until_ready((id_logits, class_logit, angle_pred))

    assert id_logits.shape == (batch, TOTAL_NUMBER_OF_BEES)
    assert class_logit.shape == (batch, 1)
    assert angle_pred.shape == (batch, 1)
    assert jnp.allclose(id_logits, ref_id, atol=1e-5)
    assert jnp.allclose(class_logit, ref_cls, atol=1e-5)
    assert jnp.allclose(angle_pred, ref_ang, atol=1e-5)

    # --- bf16-streaming path: halves HBM traffic, f32 accumulation --------
    w_bf16, b_bf16, _ = prepare_fused_params(params, dtype=jnp.bfloat16)
    id_b, cls_b, ang_b = linear_evaluation_head(z, w_bf16, b_bf16, n_bees)
    jax.block_until_ready((id_b, cls_b, ang_b))
    assert jnp.allclose(id_b, ref_id, atol=5e-2, rtol=5e-2)
    assert jnp.allclose(cls_b, ref_cls, atol=5e-2, rtol=5e-2)
    assert jnp.allclose(ang_b, ref_ang, atol=5e-2, rtol=5e-2)

    print("KERNEL_OK")
</pallas_src>

<mosaic_0001>
module attributes {stable_mosaic.version = 11 : i64} {
  func.func @_fused_head_kernel(%arg0: i32, %arg1: memref<2x32xf32, #tpu.memory_space<vmem>>, %arg2: memref<32x128xf32, #tpu.memory_space<vmem>>, %arg3: memref<1x128xf32, #tpu.memory_space<vmem>>, %arg4: memref<2x128xf32, #tpu.memory_space<vmem>>) attributes {dimension_semantics = [#tpu.dimension_semantics<parallel>], iteration_bounds = array<i64: 1>, scalar_prefetch = 0 : i64, scratch_operands = 0 : i64, tpu.core_type = #tpu.core_type<tc>, window_params = [{transform_indices = @transform_0, window_bounds = array<i64: 2, 32>}, {pipeline_mode = #tpu.pipeline_mode<synchronous>, transform_indices = @transform_1, window_bounds = array<i64: 32, 128>}, {pipeline_mode = #tpu.pipeline_mode<synchronous>, transform_indices = @transform_2, window_bounds = array<i64: 1, 128>}, {transform_indices = @transform_3, window_bounds = array<i64: 2, 128>}]} {
    %c0 = arith.constant 0 : index
    %c0_0 = arith.constant 0 : index
    %0 = vector.load %arg1[%c0, %c0_0] : memref<2x32xf32, #tpu.memory_space<vmem>>, vector<2x32xf32>
    %c0_1 = arith.constant 0 : index
    %c0_2 = arith.constant 0 : index
    %1 = vector.load %arg2[%c0_1, %c0_2] : memref<32x128xf32, #tpu.memory_space<vmem>>, vector<32x128xf32>
    %cst = arith.constant dense<0.000000e+00> : vector<2x128xf32>
    %2 = tpu.matmul %0, %1, %cst {dimension_numbers = #tpu.dot_dimension_numbers<[1], [0], [0], [1], [0, 0, 1, 1], [], []>} : vector<2x32xf32>, vector<32x128xf32>, vector<2x128xf32> -> vector<2x128xf32>
    %c0_3 = arith.constant 0 : index
    %c0_4 = arith.constant 0 : index
    %3 = vector.load %arg3[%c0_3, %c0_4] : memref<1x128xf32, #tpu.memory_space<vmem>>, vector<1x128xf32>
    %4 = vector.broadcast %3 : vector<1x128xf32> to vector<2x128xf32>
    %5 = arith.addf %2, %4 : vector<2x128xf32>
    %c0_5 = arith.constant 0 : index
    %c0_6 = arith.constant 0 : index
    %6 = vector.load %arg4[%c0_5, %c0_6] : memref<2x128xf32, #tpu.memory_space<vmem>>, vector<2x128xf32>
    tpu.vector_store %arg4[%c0_5, %c0_6], %5 {strides = array<i32>} : memref<2x128xf32, #tpu.memory_space<vmem>>, vector<2x128xf32>,
    return
  }
  func.func @transform_0(%arg0: i32) -> (i32, i32) {
    %c0_i32 = arith.constant 0 : i32
    %c0_i32_0 = arith.constant 0 : i32
    return %arg0, %c0_i32 : i32, i32
  }
  func.func @transform_1(%arg0: i32) -> (i32, i32) {
    %c0_i32 = arith.constant 0 : i32
    %c0_i32_0 = arith.constant 0 : i32
    %c0_i32_1 = arith.constant 0 : i32
    return %c0_i32, %c0_i32_0 : i32, i32
  }
  func.func @transform_2(%arg0: i32) -> (i32, i32) {
    %c0_i32 = arith.constant 0 : i32
    %c0_i32_0 = arith.constant 0 : i32
    %c0_i32_1 = arith.constant 0 : i32
    return %c0_i32, %c0_i32_0 : i32, i32
  }
  func.func @transform_3(%arg0: i32) -> (i32, i32) {
    %c0_i32 = arith.constant 0 : i32
    %c0_i32_0 = arith.constant 0 : i32
    return %arg0, %c0_i32 : i32, i32
  }
}

</mosaic_0001>

<llo_original>
// kernel: tpu_custom_call.1
$region0: #{tpu_custom_call.1}
  #allocation0 [shape = 'u32[]', space=smem, size = 0x4, offset = 0x4, fixed_abs, tag = 'smem constant byte address 0x4 - core index']
  #allocation1 [shape = 'u32[144,128]{1,0:T(1,128)}', space=vmem, size = 0x12000, scoped, tag = 'internal scratch']
  %s0 = inlined_call_operand.hbm [shape: f32[2,32], index: 0, kind: input, shape index: {}]
  %s1 = inlined_call_operand.hbm [shape: f32[32,128], index: 1, kind: input, shape index: {}]
  %s2 = inlined_call_operand.vmem [shape: f32[1,128], index: 2, kind: input, shape index: {}]
  %s3 = inlined_call_operand.hbm [shape: f32[2,128], index: 3, kind: output, shape index: {}]
  %s4 = sld [smem:[#allocation0]]
  $region30: #{tpu_custom_call.1} parent=0
    _
  %s6 = ssub.s32 1, %s4
  %s7 = scalar_select 0, %s6, %s4
  $region1: #{tpu_custom_call.1} parent=0
    #allocation2 [shape = 'u8[1024]{0}', space=vmem, size = 0x400, scoped, tag = 'input window, operand 0, single buffered']
    #allocation3 [shape = 's32[1]{0}', space=sflag, size = 0x4, scoped, tag = 'scoped memory for tpu_custom_call.1']
    #allocation4 [shape = 's32[1]{0}', space=sflag, size = 0x4, scoped, tag = 'scoped memory for tpu_custom_call.1']
    #allocation5 [shape = 'u8[16384]{0}', space=vmem, size = 0x4000, scoped, tag = 'input window, operand 1, single buffered']
    #allocation6 [shape = 's32[1]{0}', space=sflag, size = 0x4, scoped, tag = 'scoped memory for tpu_custom_call.1']
    #allocation7 [shape = 'u8[1024]{0}', space=vmem, size = 0x400, scoped, tag = 'output window, operand 0, single buffered']
    %8 = vsyncpa [#allocation3], 0
    %9 = vsyncpa [#allocation6], 0
    %10 = vsyncpa [#allocation4], 0
    // Predicated region
    $region2: #{tpu_custom_call.1} parent=1 // pred_check
      _
    $region3: #{tpu_custom_call.1} parent=1 // pred_check_branch
      %12 = sbr.rel (0) target = $region5
    $region4: #{tpu_custom_call.1} parent=1 // pred_region
      %s14 = ssub.s32 32, 32
      %15 = vsyncadd [#allocation3], %s14
      %s17 = sshll.u32 [#allocation2], 4
      %s18 = int_to_ptr.vmem [resolvable:$true] %s17
      %20 = dma.hbm_to_vmem [thread:$0]  %s0, 32, %s18, [#allocation3]
    $region5: #{tpu_custom_call.1} parent=1 // pred_fallthru
      _
    // Predicated region
    $region6: #{tpu_custom_call.1} parent=1 // pred_check
      _
    $region7: #{tpu_custom_call.1} parent=1 // pred_check_branch
      %22 = sbr.rel (0) target = $region9
    $region8: #{tpu_custom_call.1} parent=1 // pred_region
      %s24 = ssub.s32 512, 512
      %25 = vsyncadd [#allocation6], %s24
      %s26 = sshll.u32 [#allocation5], 4
      %s27 = int_to_ptr.vmem [resolvable:$true] %s26
      %32 = dma.hbm_to_vmem [thread:$0]  %s1, 512, %s27, [#allocation6], 128, 128, 8
    $region9: #{tpu_custom_call.1} parent=1 // pred_fallthru
      _
    // Predicated region
    $region10: #{tpu_custom_call.1} parent=1 // pred_check
      _
    $region11: #{tpu_custom_call.1} parent=1 // pred_check_branch
      %34 = sbr.rel (0) target = $region13
    $region12: #{tpu_custom_call.1} parent=1 // pred_region
      _
    $region13: #{tpu_custom_call.1} parent=1 // pred_fallthru
      _
    // Predicated region
    $region14: #{tpu_custom_call.1} parent=1 // pred_check
      _
    $region15: #{tpu_custom_call.1} parent=1 // pred_check_branch
      %36 = sbr.rel (0) target = $region17
    $region16: #{tpu_custom_call.1} parent=1 // pred_region
      %37 = dma.done [#allocation3], 32
    $region17: #{tpu_custom_call.1} parent=1 // pred_fallthru
      _
    // Predicated region
    $region18: #{tpu_custom_call.1} parent=1 // pred_check
      _
    $region19: #{tpu_custom_call.1} parent=1 // pred_check_branch
      %39 = sbr.rel (0) target = $region21
    $region20: #{tpu_custom_call.1} parent=1 // pred_region
      %40 = dma.done [#allocation6], 512
    $region21: #{tpu_custom_call.1} parent=1 // pred_fallthru
      _
    %v41 = vld [vmem:[#allocation2] sm:$0x3]
    %v42 = vld [vmem:[#allocation5] sm:$0xff]
    %v43 = vld [vmem:[#allocation5 + $0x8] sm:$0xff]
    %v44 = vld [vmem:[#allocation5 + $0x10] sm:$0xff]
    %v45 = vld [vmem:[#allocation5 + $0x18] sm:$0xff]
    %v46 = vld [vmem:[%s2] sm:$0x1]
    %v48 = vlaneseq
    %v49 = vshrl.u32 %v48, 7
    %v50 = vsub.s32 0, %v49
    %v51 = vrot.slane %v46, %v50
    %vm53 = vcmask 261120
    %v55 = vsel %vm53, %v41, 0
    %57 = vmatprep.subr.mxu0 0.0
    %58 = vmatpush1.msra.mxu0 %v42
    %59 = vmatprep.subr.mxu0 0.0
    %60 = vmatpush1.msra.mxu0 %v43
    %61 = vmatprep.subr.mxu0 0.0
    %62 = vmatpush1.msra.mxu0 %v44
    %63 = vmatprep.subr.mxu0 0.0
    %64 = vmatpush1.msra.mxu0 %v45
    %65 = vmatprep.subr.mxu0 0.0
    %66 = vmatpush1.msra.mxu0 0.0
    %67 = vmatprep.subr.mxu0 0.0
    %68 = vmatpush1.msra.mxu0 0.0
    %69 = vmatprep.subr.mxu0 0.0
    %70 = vmatpush1.msra.mxu0 0.0
    %71 = vmatprep.subr.mxu0 0.0
    %72 = vmatpush1.msra.mxu0 0.0
    %73 = vmatprep.subr.mxu0 0.0
    %74 = vmatpush1.msra.mxu0 0.0
    %75 = vmatprep.subr.mxu0 0.0
    %76 = vmatpush1.msra.mxu0 0.0
    %77 = vmatprep.subr.mxu0 0.0
    %78 = vmatpush1.msra.mxu0 0.0
    %79 = vmatprep.subr.mxu0 0.0
    %80 = vmatpush1.msra.mxu0 0.0
    %81 = vmatprep.subr.mxu0 0.0
    %82 = vmatpush1.msra.mxu0 0.0
    %83 = vmatprep.subr.mxu0 0.0
    %84 = vmatpush1.msra.mxu0 0.0
    %85 = vmatprep.subr.mxu0 0.0
    %86 = vmatpush1.msra.mxu0 0.0
    %87 = vmatprep.subr.mxu0 0.0
    %88 = vmatpush1.msra.mxu0 0.0
    %89 = vmatprep.subr.mxu0 0.0
    %90 = vmatpush1.msra.mxu0 0.0
    %91 = vmatprep.subr.mxu0 0.0
    %92 = vmatpush1.msra.mxu0 0.0
    %93 = vmatprep.subr.mxu0 0.0
    %94 = vmatpush1.msra.mxu0 0.0
    %95 = vmatprep.subr.mxu0 0.0
    %96 = vmatpush1.msra.mxu0 0.0
    %97 = vmatprep.subr.mxu0 0.0
    %98 = vmatpush1.msra.mxu0 0.0
    %99 = vmatprep.subr.mxu0 0.0
    %100 = vmatpush1.msra.mxu0 0.0
    %101 = vmatprep.subr.mxu0 0.0
    %102 = vmatpush1.msra.mxu0 0.0
    %103 = vmatprep.subr.mxu0 0.0
    %104 = vmatpush1.msra.mxu0 0.0
    %105 = vmatprep.subr.mxu0 0.0
    %106 = vmatpush1.msra.mxu0 0.0
    %107 = vmatprep.subr.mxu0 0.0
    %108 = vmatpush1.msra.mxu0 0.0
    %109 = vmatprep.subr.mxu0 0.0
    %110 = vmatpush1.msra.mxu0 0.0
    %111 = vmatprep.subr.mxu0 0.0
    %112 = vmatpush1.msra.mxu0 0.0
    %113 = vmatprep.subr.mxu0 0.0
    %114 = vmatpush1.msra.mxu0 0.0
    %115 = vmatprep.subr.mxu0 0.0
    %116 = vmatpush1.msra.mxu0 0.0
    %117 = vmatprep.subr.mxu0 0.0
    %118 = vmatpush1.msra.mxu0 0.0
    %119 = vmatprep.subr.mxu0 0.0
    %120 = vmatpush1.msra.mxu0 0.0
    %121 = vmatprep.mubr.f32.mxu0 0.0
    %122 = vmatmul.mubr.f32.gmra.mrb[0].mxu0 %v55
    %v123 = vpop.f32.mrb[0].mxu0
    %v124 = vadd.f32 %v51, %v123
    %v125 = vpop.f32.mrb[0].mxu0
    %126 = vdwg.mxu0
    %127 = vst [vmem:[#allocation7] sm:$0x3] %v124
    // Predicated region
    $region22: #{tpu_custom_call.1} parent=1 // pred_check
      _
    $region23: #{tpu_custom_call.1} parent=1 // pred_check_branch
      %129 = sbr.rel (0) target = $region25
    $region24: #{tpu_custom_call.1} parent=1 // pred_region
      %s131 = ssub.s32 32, 32
      %132 = vsyncadd [#allocation4], %s131
      %s134 = sshll.u32 [#allocation7], 4
      %s135 = int_to_ptr.vmem [resolvable:$true] %s134
      %137 = dma.vmem_to_hbm [thread:$0]  %s135, 32, %s3, [#allocation4]
    $region25: #{tpu_custom_call.1} parent=1 // pred_fallthru
      _
    // Predicated region
    $region26: #{tpu_custom_call.1} parent=1 // pred_check
      _
    $region27: #{tpu_custom_call.1} parent=1 // pred_check_branch
      %139 = sbr.rel (0) target = $region29
    $region28: #{tpu_custom_call.1} parent=1 // pred_region
      %140 = dma.done [#allocation4], 32
    $region29: #{tpu_custom_call.1} parent=1 // pred_fallthru
      _
    %141 = vsyncpa [#allocation3], 1
    %142 = vsyncpa [#allocation6], 1
    %143 = vsyncpa [#allocation4], 1

</llo_original>
